<compile_context>
chip_gen: v7x
topology: tpu7x:2x2x1
jax: 0.10.0
libtpu: 0.0.40
codegen_flags: <defaults>
</compile_context>

<pallas_src>
import math

import jax
import jax.numpy as jnp
from jax.experimental import pallas as pl
from jax.experimental.pallas import tpu as pltpu

_INV_SQRT2 = 0.7071067811865476


def _round_up(x, m):
    return ((x + m - 1) // m) * m


def _sublane(dtype):
    # Sublane packing: 8 rows for 32-bit, 16 for 16-bit, 32 for 8-bit dtypes.
    return max(8, 32 // jnp.dtype(dtype).itemsize)


def _pick_tile(requested, total, unit=128):
    """Largest multiple of `unit` that divides `total` (itself a multiple of
    `unit`) and does not exceed `requested` (bumped up to at least `unit`)."""
    t = max(unit, (min(requested, total) // unit) * unit)
    while total % t:
        t -= unit
    return t


def _default_vmem_limit_bytes():
    cap = 128 * 1024 * 1024
    try:
        info = pltpu.get_tpu_info()
        cap = int(getattr(info, "vmem_capacity_bytes", cap) or cap)
    except Exception:
        pass
    # ~25% headroom under physical VMEM: 48 MiB on v7x (64 MiB parts),
    # 96 MiB on v5e / v6e (128 MiB parts).
    return min(96 * 1024 * 1024, (cap * 3) // 4)


def _gelu_exact(h):
    # Exact (erf-form) GELU via a 1.5e-7-accurate rational erf approximation
    # (A&S 7.1.26).  exp() and the divide run on the EUP (separate VLIW slot);
    # the remaining ~15 VALU ops are cheaper than a full erf expansion.
    z = h * _INV_SQRT2
    az = jnp.abs(z)
    t = 1.0 / (1.0 + 0.3275911 * az)
    poly = t * (0.254829592 + t * (-0.284496736 + t * (1.421413741
             + t * (-1.453152027 + t * 1.061405429))))
    erf_abs = 1.0 - poly * jnp.exp(-az * az)
    erf_z = jnp.where(z >= 0.0, erf_abs, -erf_abs)
    return 0.5 * h * (1.0 + erf_z)


def _block_kernel(x_ref, w_ref, b_ref, xres_ref, o_ref, acc_ref):
    # x_ref   : (tm, tk)  LHS tile (native dtype -> bf16 MXU path for bf16 nets)
    # w_ref   : (tk, tn)  weight tile, pre-transposed to (D_in, D_out)
    # b_ref   : (1,  tn)  bias tile
    # xres_ref: (tm, tn)  residual x tile (only read in the finalize step)
    # o_ref   : (tm, tn)  output tile
    # acc_ref : (tm, tn)  f32 accumulator (VMEM scratch, persists across K steps)
    k = pl.program_id(2)

    @pl.when(k == 0)
    def _init():
        acc_ref[...] = jnp.zeros_like(acc_ref)

    acc_ref[...] += jnp.dot(x_ref[...], w_ref[...],
                            preferred_element_type=jnp.float32)

    @pl.when(k == pl.num_programs(2) - 1)
    def _finalize():
        h = acc_ref[...] + b_ref[...].astype(jnp.float32)
        g = _gelu_exact(h)
        o_ref[...] = (xres_ref[...].astype(jnp.float32) + g).astype(o_ref.dtype)


def prepare_block_params(weight, bias):
    """One-time parameter prep (hoisted out of the per-call forward path).

    Transposes PyTorch's (out_features, in_features) weight to (in, out) and
    zero-pads both dims (and the bias) to a multiple of 128 so kernel loads and
    stores are lane-dense.  Call once at parameter-setup time.
    """
    D_out, D_in = weight.shape
    assert D_out == D_in, "Block uses a square Linear(size, size)"
    D = D_in
    Dp = _round_up(D, 128)
    w_t = jnp.asarray(weight).T
    b = jnp.asarray(bias)
    if Dp != D:
        w_t = jnp.pad(w_t, ((0, Dp - D), (0, Dp - D)))
        b = jnp.pad(b, (0, Dp - D))
    return w_t, b.reshape(1, Dp)


def block_forward(x, w_t, b_row, *, tm=1024, tn=1024, tk=512,
                  weight_buffers=3, vmem_limit_bytes=None):
    """x: [B, S, D].  (w_t, b_row) come from prepare_block_params(weight, bias)."""
    B, S, D = x.shape
    Dp = w_t.shape[0]
    assert w_t.shape == (Dp, Dp) and b_row.shape == (1, Dp) and Dp % 128 == 0
    assert D <= Dp
    dtype = x.dtype
    M = B * S
    sub = _sublane(dtype)

    # Tile selection: tn / tk are lane-aligned divisors of Dp; tm is clamped to
    # the sublane packing for tiny M.
    tn = _pick_tile(tn, Dp)
    tk = _pick_tile(tk, Dp)
    tm = _round_up(max(sub, min(tm, _round_up(M, sub))), sub)
    Mp = _round_up(M, tm)

    nn = Dp // tn
    nk = Dp // tk
    nm = Mp // tm
    # v7x megacore: ensure the parallel (M, N) grid has >= 2 tiles so both
    # TensorCores get work; split the row tile in two when it would not.
    if nm * nn < 2 and M > sub:
        tm_half = _round_up(-(-M // 2), sub)
        if tm_half < tm:
            tm = tm_half
            Mp = _round_up(M, tm)
            nm = Mp // tm

    x2 = x.reshape(M, D)
    if (Mp, Dp) != (M, D):
        x_p = jnp.pad(x2, ((0, Mp - M), (0, Dp - D)))
    else:
        x_p = x2  # already aligned: skip the pad copy

    # Weight is the dominant K-streamed operand: deepen its pipelining when the
    # K grid is deep enough (graceful fallback for Pallas versions without it).
    w_index = lambda i, j, k: (k, j)
    if weight_buffers and nk >= weight_buffers:
        try:
            w_spec = pl.BlockSpec((tk, tn), w_index,
                                  pipeline_mode=pl.Buffered(weight_buffers))
        except Exception:
            w_spec = pl.BlockSpec((tk, tn), w_index)
    else:
        w_spec = pl.BlockSpec((tk, tn), w_index)

    if vmem_limit_bytes is None:
        vmem_limit_bytes = _default_vmem_limit_bytes()

    itemsize = jnp.dtype(dtype).itemsize
    cost = pl.CostEstimate(
        flops=2 * Mp * Dp * Dp,
        transcendentals=Mp * Dp,
        bytes_accessed=itemsize * (Mp * Dp * (nn + 2) + Dp * Dp * nm),
    )

    out = pl.pallas_call(
        _block_kernel,
        out_shape=jax.ShapeDtypeStruct((Mp, Dp), dtype),
        grid_spec=pltpu.PrefetchScalarGridSpec(
            num_scalar_prefetch=0,
            grid=(nm, nn, nk),                                   # K innermost
            in_specs=[
                pl.BlockSpec((tm, tk), lambda i, j, k: (i, k)),  # x (matmul LHS)
                w_spec,                                          # W^T tile (K, N)
                pl.BlockSpec((1, tn), lambda i, j, k: (0, j)),   # bias tile
                pl.BlockSpec((tm, tn), lambda i, j, k: (i, j)),  # x residual tile
            ],
            out_specs=pl.BlockSpec((tm, tn), lambda i, j, k: (i, j)),
            scratch_shapes=[pltpu.VMEM((tm, tn), jnp.float32)],
        ),
        compiler_params=pltpu.CompilerParams(
            dimension_semantics=("parallel", "parallel", "arbitrary"),
            vmem_limit_bytes=int(vmem_limit_bytes),
        ),
        cost_estimate=cost,
    )(x_p, w_t, b_row, x_p)

    if (Mp, Dp) != (M, D):
        out = out[:M, :D]
    return out.reshape(B, S, D)


def _ref_forward(x, weight, bias):
    h = jnp.einsum("bsd,ed->bse", x, weight) + bias
    return x + jax.nn.gelu(h, approximate=False)


if __name__ == "__main__":
    key = jax.random.PRNGKey(0)

    def check(B, S, D, tol, **tile_kw):
        k = jax.random.fold_in(key, B * 100003 + S * 101 + D)
        kx, kw, kb = jax.random.split(k, 3)
        bound = 1.0 / math.sqrt(D)
        x = jax.random.normal(kx, (B, S, D), dtype=jnp.float32)
        weight = jax.random.uniform(kw, (D, D), jnp.float32, -bound, bound)
        bias = jax.random.uniform(kb, (D,), jnp.float32, -bound, bound)

        w_t, b_row = prepare_block_params(weight, bias)      # one-time prep
        out = jax.block_until_ready(block_forward(x, w_t, b_row, **tile_kw))
        ref = _ref_forward(x, weight, bias)
        assert out.shape == (B, S, D) and out.dtype == x.dtype
        err = float(jnp.max(jnp.abs(out - ref)))
        assert jnp.allclose(out, ref, atol=tol, rtol=tol), (
            f"mismatch for ({B},{S},{D}): max abs err {err}")

    # Primary small shape (D=32): D padded to 128, row tile split across 2 TCs.
    check(2, 8, 32, 5e-5)
    # Unaligned M and D: exercises multi-tile M / N / K and both-dims padding.
    check(2, 24, 200, 2e-4, tm=16, tn=128, tk=128)
    # Aligned D (no pad/slice path), deep K pipeline (Buffered weight), row split.
    check(1, 16, 384, 2e-4, tk=128)

    print("KERNEL_OK")
</pallas_src>

<mosaic_0001>
module attributes {stable_mosaic.version = 11 : i64} {
  func.func @_block_kernel(%arg0: i32, %arg1: i32, %arg2: i32, %arg3: memref<8x128xf32, #tpu.memory_space<vmem>>, %arg4: memref<128x128xf32, #tpu.memory_space<vmem>>, %arg5: memref<1x128xf32, #tpu.memory_space<vmem>>, %arg6: memref<8x128xf32, #tpu.memory_space<vmem>>, %arg7: memref<8x128xf32, #tpu.memory_space<vmem>>, %arg8: memref<8x128xf32, #tpu.memory_space<vmem>>) attributes {dimension_semantics = [#tpu.dimension_semantics<parallel>, #tpu.dimension_semantics<parallel>, #tpu.dimension_semantics<arbitrary>], iteration_bounds = array<i64: 2, 1, 1>, scalar_prefetch = 0 : i64, scratch_operands = 1 : i64, tpu.core_type = #tpu.core_type<tc>, window_params = [{transform_indices = @transform_0, window_bounds = array<i64: 8, 128>}, {transform_indices = @transform_1, window_bounds = array<i64: 128, 128>}, {transform_indices = @transform_2, window_bounds = array<i64: 1, 128>}, {transform_indices = @transform_3, window_bounds = array<i64: 8, 128>}, {transform_indices = @transform_4, window_bounds = array<i64: 8, 128>}]} {
    %c0_i32 = arith.constant 0 : i32
    %0 = arith.cmpi eq, %arg2, %c0_i32 : i32
    %1 = arith.extui %0 : i1 to i32
    %c0_i32_0 = arith.constant 0 : i32
    %2 = arith.cmpi ne, %1, %c0_i32_0 : i32
    scf.if %2 {
      %cst_10 = arith.constant 0.000000e+00 : f32
      %12 = vector.broadcast %cst_10 : f32 to vector<8x128xf32>
      %c0_11 = arith.constant 0 : index
      %c0_12 = arith.constant 0 : index
      %13 = vector.load %arg8[%c0_11, %c0_12] : memref<8x128xf32, #tpu.memory_space<vmem>>, vector<8x128xf32>
      tpu.vector_store %arg8[%c0_11, %c0_12], %12 {strides = array<i32>} : memref<8x128xf32, #tpu.memory_space<vmem>>, vector<8x128xf32>,
    } else {
    }
    %c0 = arith.constant 0 : index
    %c0_1 = arith.constant 0 : index
    %3 = vector.load %arg8[%c0, %c0_1] : memref<8x128xf32, #tpu.memory_space<vmem>>, vector<8x128xf32>
    %c0_2 = arith.constant 0 : index
    %c0_3 = arith.constant 0 : index
    %4 = vector.load %arg3[%c0_2, %c0_3] : memref<8x128xf32, #tpu.memory_space<vmem>>, vector<8x128xf32>
    %c0_4 = arith.constant 0 : index
    %c0_5 = arith.constant 0 : index
    %5 = vector.load %arg4[%c0_4, %c0_5] : memref<128x128xf32, #tpu.memory_space<vmem>>, vector<128x128xf32>
    %cst = arith.constant dense<0.000000e+00> : vector<8x128xf32>
    %6 = tpu.matmul %4, %5, %cst {dimension_numbers = #tpu.dot_dimension_numbers<[1], [0], [0], [1], [0, 0, 1, 1], [], []>} : vector<8x128xf32>, vector<128x128xf32>, vector<8x128xf32> -> vector<8x128xf32>
    %7 = arith.addf %3, %6 : vector<8x128xf32>
    %c0_6 = arith.constant 0 : index
    %c0_7 = arith.constant 0 : index
    %8 = vector.load %arg8[%c0_6, %c0_7] : memref<8x128xf32, #tpu.memory_space<vmem>>, vector<8x128xf32>
    tpu.vector_store %arg8[%c0_6, %c0_7], %7 {strides = array<i32>} : memref<8x128xf32, #tpu.memory_space<vmem>>, vector<8x128xf32>,
    %c0_i32_8 = arith.constant 0 : i32
    %9 = arith.cmpi eq, %arg2, %c0_i32_8 : i32
    %10 = arith.extui %9 : i1 to i32
    %c0_i32_9 = arith.constant 0 : i32
    %11 = arith.cmpi ne, %10, %c0_i32_9 : i32
    scf.if %11 {
      %c0_10 = arith.constant 0 : index
      %c0_11 = arith.constant 0 : index
      %12 = vector.load %arg8[%c0_10, %c0_11] : memref<8x128xf32, #tpu.memory_space<vmem>>, vector<8x128xf32>
      %c0_12 = arith.constant 0 : index
      %c0_13 = arith.constant 0 : index
      %13 = vector.load %arg5[%c0_12, %c0_13] : memref<1x128xf32, #tpu.memory_space<vmem>>, vector<1x128xf32>
      %14 = vector.broadcast %13 : vector<1x128xf32> to vector<8x128xf32>
      %15 = arith.addf %12, %14 : vector<8x128xf32>
      %cst_14 = arith.constant 0.707106769 : f32
      %16 = vector.broadcast %cst_14 : f32 to vector<8x128xf32>
      %17 = arith.mulf %15, %16 : vector<8x128xf32>
      %18 = math.absf %17 : vector<8x128xf32>
      %cst_15 = arith.constant 0.327591091 : f32
      %19 = vector.broadcast %cst_15 : f32 to vector<8x128xf32>
      %20 = arith.mulf %19, %18 : vector<8x128xf32>
      %cst_16 = arith.constant 1.000000e+00 : f32
      %21 = vector.broadcast %cst_16 : f32 to vector<8x128xf32>
      %22 = arith.addf %21, %20 : vector<8x128xf32>
      %cst_17 = arith.constant 1.000000e+00 : f32
      %23 = vector.broadcast %cst_17 : f32 to vector<8x128xf32>
      %24 = arith.divf %23, %22 : vector<8x128xf32>
      %cst_18 = arith.constant 1.06140542 : f32
      %25 = vector.broadcast %cst_18 : f32 to vector<8x128xf32>
      %26 = arith.mulf %24, %25 : vector<8x128xf32>
      %cst_19 = arith.constant -1.45315206 : f32
      %27 = vector.broadcast %cst_19 : f32 to vector<8x128xf32>
      %28 = arith.addf %27, %26 : vector<8x128xf32>
      %29 = arith.mulf %24, %28 : vector<8x128xf32>
      %cst_20 = arith.constant 1.42141378 : f32
      %30 = vector.broadcast %cst_20 : f32 to vector<8x128xf32>
      %31 = arith.addf %30, %29 : vector<8x128xf32>
      %32 = arith.mulf %24, %31 : vector<8x128xf32>
      %cst_21 = arith.constant -0.284496725 : f32
      %33 = vector.broadcast %cst_21 : f32 to vector<8x128xf32>
      %34 = arith.addf %33, %32 : vector<8x128xf32>
      %35 = arith.mulf %24, %34 : vector<8x128xf32>
      %cst_22 = arith.constant 0.254829586 : f32
      %36 = vector.broadcast %cst_22 : f32 to vector<8x128xf32>
      %37 = arith.addf %36, %35 : vector<8x128xf32>
      %38 = arith.mulf %24, %37 : vector<8x128xf32>
      %cst_23 = arith.constant 0.000000e+00 : f32
      %39 = vector.broadcast %cst_23 : f32 to vector<8x128xf32>
      %40 = arith.subf %39, %18 : vector<8x128xf32>
      %41 = arith.mulf %40, %18 : vector<8x128xf32>
      %42 = math.exp %41 : vector<8x128xf32>
      %43 = arith.mulf %38, %42 : vector<8x128xf32>
      %cst_24 = arith.constant 1.000000e+00 : f32
      %44 = vector.broadcast %cst_24 : f32 to vector<8x128xf32>
      %45 = arith.subf %44, %43 : vector<8x128xf32>
      %cst_25 = arith.constant 0.000000e+00 : f32
      %46 = vector.broadcast %cst_25 : f32 to vector<8x128xf32>
      %47 = arith.cmpf oge, %17, %46 : vector<8x128xf32>
      %cst_26 = arith.constant 0.000000e+00 : f32
      %48 = vector.broadcast %cst_26 : f32 to vector<8x128xf32>
      %49 = arith.subf %48, %45 : vector<8x128xf32>
      %50 = arith.select %47, %45, %49 : vector<8x128xi1>, vector<8x128xf32>
      %cst_27 = arith.constant 5.000000e-01 : f32
      %51 = vector.broadcast %cst_27 : f32 to vector<8x128xf32>
      %52 = arith.mulf %51, %15 : vector<8x128xf32>
      %cst_28 = arith.constant 1.000000e+00 : f32
      %53 = vector.broadcast %cst_28 : f32 to vector<8x128xf32>
      %54 = arith.addf %53, %50 : vector<8x128xf32>
      %55 = arith.mulf %52, %54 : vector<8x128xf32>
      %c0_29 = arith.constant 0 : index
      %c0_30 = arith.constant 0 : index
      %56 = vector.load %arg6[%c0_29, %c0_30] : memref<8x128xf32, #tpu.memory_space<vmem>>, vector<8x128xf32>
      %57 = arith.addf %56, %55 : vector<8x128xf32>
      %c0_31 = arith.constant 0 : index
      %c0_32 = arith.constant 0 : index
      %58 = vector.load %arg7[%c0_31, %c0_32] : memref<8x128xf32, #tpu.memory_space<vmem>>, vector<8x128xf32>
      tpu.vector_store %arg7[%c0_31, %c0_32], %57 {strides = array<i32>} : memref<8x128xf32, #tpu.memory_space<vmem>>, vector<8x128xf32>,
    } else {
    }
    return
  }
  func.func @transform_0(%arg0: i32, %arg1: i32, %arg2: i32) -> (i32, i32) {
    %c0_i32 = arith.constant 0 : i32
    return %arg0, %arg2 : i32, i32
  }
  func.func @transform_1(%arg0: i32, %arg1: i32, %arg2: i32) -> (i32, i32) {
    %c0_i32 = arith.constant 0 : i32
    return %arg2, %arg1 : i32, i32
  }
  func.func @transform_2(%arg0: i32, %arg1: i32, %arg2: i32) -> (i32, i32) {
    %c0_i32 = arith.constant 0 : i32
    %c0_i32_0 = arith.constant 0 : i32
    return %c0_i32, %arg1 : i32, i32
  }
  func.func @transform_3(%arg0: i32, %arg1: i32, %arg2: i32) -> (i32, i32) {
    %c0_i32 = arith.constant 0 : i32
    return %arg0, %arg1 : i32, i32
  }
  func.func @transform_4(%arg0: i32, %arg1: i32, %arg2: i32) -> (i32, i32) {
    %c0_i32 = arith.constant 0 : i32
    return %arg0, %arg1 : i32, i32
  }
}

</mosaic_0001>

<llo_original>
// kernel: tpu_custom_call.1
$region0: #{tpu_custom_call.1}
  #allocation0 [shape = 'u32[]', space=smem, size = 0x4, offset = 0x4, fixed_abs, tag = 'smem constant byte address 0x4 - core index']
  #allocation1 [shape = 'u32[144,128]{1,0:T(1,128)}', space=vmem, size = 0x12000, scoped, tag = 'internal scratch']
  #allocation2 [shape = 'f32[8,128]{1,0:T(8,128)}', space=vmem, size = 0x1000, scoped, tag = 'scratch operand']
  %s0 = inlined_call_operand.hbm [shape: f32[16,128], index: 0, kind: input, shape index: {}]
  %s1 = inlined_call_operand.hbm [shape: f32[128,128], index: 1, kind: input, shape index: {}]
  %s2 = inlined_call_operand.hbm [shape: f32[1,128], index: 2, kind: input, shape index: {}]
  %s3 = inlined_call_operand.hbm [shape: f32[16,128], index: 3, kind: input, shape index: {}]
  %s4 = inlined_call_operand.hbm [shape: f32[16,128], index: 4, kind: output, shape index: {}]
  %s5 = sld [smem:[#allocation0]]
  $region73: #{tpu_custom_call.1} parent=0
    _
  %s7 = ssub.s32 1, %s5
  %s8 = scalar_select 0, %s7, %s5
  $region1: #{tpu_custom_call.1} parent=0
    #allocation3 [shape = 'u8[8192]{0}', space=vmem, size = 0x2000, scoped, tag = 'input window, operand 0']
    #allocation4 [shape = 's32[2]{0}', space=sflag, size = 0x8, scoped, tag = 'scoped memory for tpu_custom_call.1']
    #allocation5 [shape = 's32[2]{0}', space=sflag, size = 0x8, scoped, tag = 'scoped memory for tpu_custom_call.1']
    #allocation6 [shape = 'u8[65536]{0}', space=vmem, size = 0x10000, scoped, tag = 'input window, operand 1, single buffered']
    #allocation7 [shape = 's32[1]{0}', space=sflag, size = 0x4, scoped, tag = 'scoped memory for tpu_custom_call.1']
    #allocation8 [shape = 'u8[512]{0}', space=vmem, size = 0x400, scoped, tag = 'input window, operand 2, single buffered']
    #allocation9 [shape = 'u8[8192]{0}', space=vmem, size = 0x2000, scoped, tag = 'input window, operand 3']
    #allocation10 [shape = 's32[2]{0}', space=sflag, size = 0x8, scoped, tag = 'scoped memory for tpu_custom_call.1']
    #allocation11 [shape = 'u8[8192]{0}', space=vmem, size = 0x2000, scoped, tag = 'output window, operand 0']
    %9 = vsyncpa [#allocation4], 0
    %s10 = scalar_lea.sflag [#allocation4], 1
    %11 = vsyncpa %s10, 0
    %12 = vsyncpa [#allocation7], 0
    %13 = vsyncpa [#allocation10], 0
    %s14 = scalar_lea.sflag [#allocation10], 1
    %15 = vsyncpa %s14, 0
    %16 = vsyncpa [#allocation5], 0
    %s17 = scalar_lea.sflag [#allocation5], 1
    %18 = vsyncpa %s17, 0
    loop: start=0, step=1, limit=4
    $region2: #{tpu_custom_call.1} parent=1 // loop_pre_header
      _
    $region3: #{tpu_custom_call.1} parent=1 // loop_header
      %s20 = sphi 0, %s24
      %p21 = scmp.ge.s32.totalorder %s20, 4
      %s27 = sphi 0, %s46
      %s28 = sphi 0, %s42
      %s29 = sphi 0, %s38
      %s30 = sphi 0, %s27
      %s31 = sphi 0, %s28
      %s32 = sphi 0, %s29
      %s33 = sphi 0, %s30
      %s34 = sphi 0, %s31
      %s35 = sphi 0, %s32
      %s51 = sphi 0, %s53
      %s54 = sphi 0, %s51
      %s55 = sphi 0, %s54
      %s71 = sphi 0, %s55
      %s79 = sphi 0, %s81
      %s82 = sphi 0, %s79
      %s83 = sphi 0, %s82
      %s99 = sphi 0, %s83
      %s105 = sphi 0, %s107
      %s108 = sphi 0, %s105
      %s109 = sphi 0, %s108
      %s125 = sphi 0, %s109
      %s133 = sphi 0, %s135
      %s136 = sphi 0, %s133
      %s137 = sphi 0, %s136
      %s153 = sphi 0, %s137
      %s161 = sphi 0, %s163
      %s164 = sphi 0, %s161
      %s165 = sphi 0, %s164
      %s181 = sphi 0, %s165
    $region4: #{tpu_custom_call.1} parent=1 // loop_header_branch
      %23 = sbr.rel (%p21) target = $region8
    $region5: #{tpu_custom_call.1} parent=1 // loop_body
      %s25 = ssub.s32 %s20, 1
      %s26 = ssub.s32 %s20, 2
      %s36 = sadd.s32 1, %s29
      %p37 = scmp.ge.s32.totalorder %s36, 1
      %s38 = scalar_select %p37, 0, %s36
      %s39 = sadd.s32 1, %s28
      %s40 = scalar_select %p37, %s39, %s28
      %p41 = scmp.ge.s32.totalorder %s40, 1
      %s42 = scalar_select %p41, 0, %s40
      %s43 = sadd.s32 1, %s27
      %s44 = scalar_select %p41, %s43, %s27
      %p45 = scmp.ge.s32.totalorder %s44, 2
      %s46 = scalar_select %p45, 0, %s44
      %s47 = ssub.s32 %s27, %s46
      %s48 = ssub.s32 %s29, %s38
      %s49 = sor.u32 %s47, %s48
      %p50 = scmp.eq.s32.totalorder %s49, 0
      %s52 = sadd.s32 %s51, 1
      %s53 = scalar_select %p50, %s51, %s52
      %p56 = pneg %p50
      %p57 = scmp.eq.s32.totalorder %s20, 1
      %p58 = por %p56, %p57
      %p59 = scmp.ne.s32.totalorder %s51, %s54
      %p60 = scmp.eq.s32.totalorder %s20, 0
      %p61 = por %p59, %p60
      %p62 = scmp.ne.s32.totalorder %s51, %s54
      %p63 = scmp.eq.s32.totalorder %s25, 1
      %p64 = por %p62, %p63
      %p65 = scmp.ne.s32.totalorder %s54, %s55
      %p66 = scmp.eq.s32.totalorder %s25, 0
      %p67 = por %p65, %p66
      %p68 = scmp.ne.s32.totalorder %s54, %s55
      %p69 = scmp.eq.s32.totalorder %s26, 1
      %p70 = por %p68, %p69
      %p72 = scmp.ne.s32.totalorder %s55, %s71
      %p73 = scmp.eq.s32.totalorder %s26, 0
      %p74 = por %p72, %p73
      %s75 = ssub.s32 %s29, %s38
      %s76 = ssub.s32 %s28, %s42
      %s77 = sor.u32 %s75, %s76
      %p78 = scmp.eq.s32.totalorder %s77, 0
      %s80 = sadd.s32 %s79, 1
      %s81 = scalar_select %p78, %s79, %s80
      %p84 = pneg %p78
      %p85 = scmp.eq.s32.totalorder %s20, 1
      %p86 = por %p84, %p85
      %p87 = scmp.ne.s32.totalorder %s79, %s82
      %p88 = scmp.eq.s32.totalorder %s20, 0
      %p89 = por %p87, %p88
      %p90 = scmp.ne.s32.totalorder %s79, %s82
      %p91 = scmp.eq.s32.totalorder %s25, 1
      %p92 = por %p90, %p91
      %p93 = scmp.ne.s32.totalorder %s82, %s83
      %p94 = scmp.eq.s32.totalorder %s25, 0
      %p95 = por %p93, %p94
      %p96 = scmp.ne.s32.totalorder %s82, %s83
      %p97 = scmp.eq.s32.totalorder %s26, 1
      %p98 = por %p96, %p97
      %p100 = scmp.ne.s32.totalorder %s83, %s99
      %p101 = scmp.eq.s32.totalorder %s26, 0
      %p102 = por %p100, %p101
      %s103 = ssub.s32 %s28, %s42
      %p104 = scmp.eq.s32.totalorder %s103, 0
      %s106 = sadd.s32 %s105, 1
      %s107 = scalar_select %p104, %s105, %s106
      %p110 = pneg %p104
      %p111 = scmp.eq.s32.totalorder %s20, 1
      %p112 = por %p110, %p111
      %p113 = scmp.ne.s32.totalorder %s105, %s108
      %p114 = scmp.eq.s32.totalorder %s20, 0
      %p115 = por %p113, %p114
      %p116 = scmp.ne.s32.totalorder %s105, %s108
      %p117 = scmp.eq.s32.totalorder %s25, 1
      %p118 = por %p116, %p117
      %p119 = scmp.ne.s32.totalorder %s108, %s109
      %p120 = scmp.eq.s32.totalorder %s25, 0
      %p121 = por %p119, %p120
      %p122 = scmp.ne.s32.totalorder %s108, %s109
      %p123 = scmp.eq.s32.totalorder %s26, 1
      %p124 = por %p122, %p123
      %p126 = scmp.ne.s32.totalorder %s109, %s125
      %p127 = scmp.eq.s32.totalorder %s26, 0
      %p128 = por %p126, %p127
      %s129 = ssub.s32 %s27, %s46
      %s130 = ssub.s32 %s28, %s42
      %s131 = sor.u32 %s129, %s130
      %p132 = scmp.eq.s32.totalorder %s131, 0
      %s134 = sadd.s32 %s133, 1
      %s135 = scalar_select %p132, %s133, %s134
      %p138 = pneg %p132
      %p139 = scmp.eq.s32.totalorder %s20, 1
      %p140 = por %p138, %p139
      %p141 = scmp.ne.s32.totalorder %s133, %s136
      %p142 = scmp.eq.s32.totalorder %s20, 0
      %p143 = por %p141, %p142
      %p144 = scmp.ne.s32.totalorder %s133, %s136
      %p145 = scmp.eq.s32.totalorder %s25, 1
      %p146 = por %p144, %p145
      %p147 = scmp.ne.s32.totalorder %s136, %s137
      %p148 = scmp.eq.s32.totalorder %s25, 0
      %p149 = por %p147, %p148
      %p150 = scmp.ne.s32.totalorder %s136, %s137
      %p151 = scmp.eq.s32.totalorder %s26, 1
      %p152 = por %p150, %p151
      %p154 = scmp.ne.s32.totalorder %s137, %s153
      %p155 = scmp.eq.s32.totalorder %s26, 0
      %p156 = por %p154, %p155
      %s157 = ssub.s32 %s27, %s46
      %s158 = ssub.s32 %s28, %s42
      %s159 = sor.u32 %s157, %s158
      %p160 = scmp.eq.s32.totalorder %s159, 0
      %s162 = sadd.s32 %s161, 1
      %s163 = scalar_select %p160, %s161, %s162
      %p166 = pneg %p160
      %p167 = scmp.eq.s32.totalorder %s20, 1
      %p168 = por %p166, %p167
      %p169 = scmp.ne.s32.totalorder %s161, %s164
      %p170 = scmp.eq.s32.totalorder %s20, 0
      %p171 = por %p169, %p170
      %p172 = scmp.ne.s32.totalorder %s161, %s164
      %p173 = scmp.eq.s32.totalorder %s25, 1
      %p174 = por %p172, %p173
      %p175 = scmp.ne.s32.totalorder %s164, %s165
      %p176 = scmp.eq.s32.totalorder %s25, 0
      %p177 = por %p175, %p176
      %p178 = scmp.ne.s32.totalorder %s164, %s165
      %p179 = scmp.eq.s32.totalorder %s26, 1
      %p180 = por %p178, %p179
      %p182 = scmp.ne.s32.totalorder %s165, %s181
      %p183 = scmp.eq.s32.totalorder %s26, 0
      %p184 = por %p182, %p183
      %p185 = scmp.le.s32.totalorder 1, %s20
      %p186 = scmp.lt.s32.totalorder %s20, 3
      %p187 = pnand %p185, %p186
      %p188 = pneg %p187
      // Predicated region
      $region9: #{tpu_custom_call.1} parent=5 // pred_check
        _
      $region10: #{tpu_custom_call.1} parent=5 // pred_check_branch
        %190 = sbr.rel (%p187) target = $region12
      $region11: #{tpu_custom_call.1} parent=5 // pred_region
        %s191 = ssub.s32 %s20, 1
        // Predicated region
        $region13: #{tpu_custom_call.1} parent=11 // pred_check
          %p192 = pneg %p95
        $region14: #{tpu_custom_call.1} parent=11 // pred_check_branch
          %194 = sbr.rel (%p192) target = $region16
        $region15: #{tpu_custom_call.1} parent=11 // pred_region
          %s195 = smul.u32 16, %s32
          %s197 = ssub.s32 2048, 2048
          %198 = vsyncadd [#allocation7], %s197
          %s199 = sadd.s32 %s31, %s195
          %s200 = smul.addr %s199, 128
          %s201 = scalar_lea.hbm %s1, %s200
          %s202 = sshll.u32 [#allocation6], 4
          %s203 = int_to_ptr.vmem [resolvable:$true] %s202
          %208 = dma.hbm_to_vmem [thread:$0]  %s201, 2048, %s203, [#allocation7], 128, 128, 8
        $region16: #{tpu_custom_call.1} parent=11 // pred_fallthru
          _
        // Predicated region
        $region17: #{tpu_custom_call.1} parent=11 // pred_check
          %p209 = pneg %p121
        $region18: #{tpu_custom_call.1} parent=11 // pred_check_branch
          %211 = sbr.rel (%p209) target = $region20
        $region19: #{tpu_custom_call.1} parent=11 // pred_region
          %s213 = ssub.s32 16, 16
          %214 = vsyncadd [#allocation7], %s213
          %s215 = smul.addr %s31, 16
          %s216 = scalar_lea.hbm %s2, %s215
          %s218 = sshll.u32 [#allocation8], 4
          %s219 = int_to_ptr.vmem [resolvable:$true] %s218
          %221 = dma.hbm_to_vmem [thread:$0]  %s216, 16, %s219, [#allocation7]
        $region20: #{tpu_custom_call.1} parent=11 // pred_fallthru
          _
      $region12: #{tpu_custom_call.1} parent=5 // pred_fallthru
        _
      %p222 = scmp.lt.s32.totalorder %s20, 2
      // Predicated region
      $region21: #{tpu_custom_call.1} parent=5 // pred_check
        %p223 = pneg %p222
      $region22: #{tpu_custom_call.1} parent=5 // pred_check_branch
        %225 = sbr.rel (%p223) target = $region24
      $region23: #{tpu_custom_call.1} parent=5 // pred_region
        // Predicated region
        $region25: #{tpu_custom_call.1} parent=23 // pred_check
          %p226 = pneg %p61
        $region26: #{tpu_custom_call.1} parent=23 // pred_check_branch
          %228 = sbr.rel (%p226) target = $region28
        $region27: #{tpu_custom_call.1} parent=23 // pred_region
          %s229 = sand.u32 %s51, 1
          %s230 = scalar_lea.sflag [#allocation4], %s229
          %s231 = sand.u32 %s51, 1
          %s232 = smul.addr %s231, 8
          %s233 = scalar_lea.vmem [#allocation3], %s232
          %s235 = ssub.s32 128, 128
          %236 = vsyncadd %s230, %s235
          %s237 = sadd.s32 %s29, %s27
          %s238 = smul.addr %s237, 128
          %s239 = scalar_lea.hbm %s0, %s238
          %s241 = sshll.u32 %s233, 4
          %s242 = int_to_ptr.vmem [resolvable:$true] %s241
          %244 = dma.hbm_to_vmem [thread:$0]  %s239, 128, %s242, %s230
        $region28: #{tpu_custom_call.1} parent=23 // pred_fallthru
          _
        // Predicated region
        $region29: #{tpu_custom_call.1} parent=23 // pred_check
          %p245 = pneg %p143
        $region30: #{tpu_custom_call.1} parent=23 // pred_check_branch
          %247 = sbr.rel (%p245) target = $region32
        $region31: #{tpu_custom_call.1} parent=23 // pred_region
          %s248 = sand.u32 %s133, 1
          %s249 = scalar_lea.sflag [#allocation10], %s248
          %s250 = sand.u32 %s133, 1
          %s251 = smul.addr %s250, 8
          %s252 = scalar_lea.vmem [#allocation9], %s251
          %s254 = ssub.s32 128, 128
          %255 = vsyncadd %s249, %s254
          %s256 = sadd.s32 %s28, %s27
          %s257 = smul.addr %s256, 128
          %s258 = scalar_lea.hbm %s3, %s257
          %s260 = sshll.u32 %s252, 4
          %s261 = int_to_ptr.vmem [resolvable:$true] %s260
          %263 = dma.hbm_to_vmem [thread:$0]  %s258, 128, %s261, %s249
        $region32: #{tpu_custom_call.1} parent=23 // pred_fallthru
          _
      $region24: #{tpu_custom_call.1} parent=5 // pred_fallthru
        _
      %p264 = scmp.le.s32.totalorder 1, %s20
      %p265 = scmp.lt.s32.totalorder %s20, 3
      %p266 = pnand %p264, %p265
      %p267 = pneg %p266
      // Predicated region
      $region33: #{tpu_custom_call.1} parent=5 // pred_check
        _
      $region34: #{tpu_custom_call.1} parent=5 // pred_check_branch
        %269 = sbr.rel (%p266) target = $region36
      $region35: #{tpu_custom_call.1} parent=5 // pred_region
        %s270 = ssub.s32 %s20, 1
        %s271 = sand.u32 %s54, 1
        %s272 = scalar_lea.sflag [#allocation4], %s271
        %s273 = sand.u32 %s54, 1
        %s274 = smul.addr %s273, 8
        %s275 = scalar_lea.vmem [#allocation3], %s274
        // Predicated region
        $region37: #{tpu_custom_call.1} parent=35 // pred_check
          %p276 = pneg %p67
        $region38: #{tpu_custom_call.1} parent=35 // pred_check_branch
          %278 = sbr.rel (%p276) target = $region40
        $region39: #{tpu_custom_call.1} parent=35 // pred_region
          %279 = dma.done %s272, 128
        $region40: #{tpu_custom_call.1} parent=35 // pred_fallthru
          _
        // Predicated region
        $region41: #{tpu_custom_call.1} parent=35 // pred_check
          %p280 = pneg %p95
        $region42: #{tpu_custom_call.1} parent=35 // pred_check_branch
          %282 = sbr.rel (%p280) target = $region44
        $region43: #{tpu_custom_call.1} parent=35 // pred_region
          %283 = dma.done [#allocation7], 2048
        $region44: #{tpu_custom_call.1} parent=35 // pred_fallthru
          _
        // Predicated region
        $region45: #{tpu_custom_call.1} parent=35 // pred_check
          %p284 = pneg %p121
        $region46: #{tpu_custom_call.1} parent=35 // pred_check_branch
          %286 = sbr.rel (%p284) target = $region48
        $region47: #{tpu_custom_call.1} parent=35 // pred_region
          %287 = dma.done [#allocation7], 16
        $region48: #{tpu_custom_call.1} parent=35 // pred_fallthru
          _
        %s288 = sand.u32 %s136, 1
        %s289 = scalar_lea.sflag [#allocation10], %s288
        %s290 = sand.u32 %s136, 1
        %s291 = smul.addr %s290, 8
        %s292 = scalar_lea.vmem [#allocation9], %s291
        // Predicated region
        $region49: #{tpu_custom_call.1} parent=35 // pred_check
          %p293 = pneg %p149
        $region50: #{tpu_custom_call.1} parent=35 // pred_check_branch
          %295 = sbr.rel (%p293) target = $region52
        $region51: #{tpu_custom_call.1} parent=35 // pred_region
          %296 = dma.done %s289, 128
        $region52: #{tpu_custom_call.1} parent=35 // pred_fallthru
          _
        %s297 = sand.u32 %s54, 1
        %s298 = scalar_lea.sflag [#allocation4], %s297
        %s299 = sand.u32 %s54, 1
        %s300 = smul.addr %s299, 8
        %s301 = scalar_lea.vmem [#allocation3], %s300
        %p302 = pneg %p67
        %p303 = pneg %p64
        %p304 = pneg %p95
        %p305 = pneg %p92
        %p306 = pneg %p121
        %p307 = pneg %p118
        %s308 = sand.u32 %s136, 1
        %s309 = scalar_lea.sflag [#allocation10], %s308
        %s310 = sand.u32 %s136, 1
        %s311 = smul.addr %s310, 8
        %s312 = scalar_lea.vmem [#allocation9], %s311
        %p313 = pneg %p149
        %p314 = pneg %p146
        %p315 = pneg %p177
        %p316 = pneg %p174
        %s317 = sand.u32 %s164, 1
        %s318 = scalar_lea.sflag [#allocation5], %s317
        %s319 = sand.u32 %s164, 1
        %s320 = smul.addr %s319, 8
        %s321 = scalar_lea.vmem [#allocation11], %s320
        %s322 = smul.u32 16, %s32
        %p323 = scmp.eq.s32.totalorder %s32, 0
        // Predicated region
        $region53: #{tpu_custom_call.1} parent=35 // pred_check
          %p324 = pneg %p323
        $region54: #{tpu_custom_call.1} parent=35 // pred_check_branch
          %326 = sbr.rel (%p324) target = $region56
        $region55: #{tpu_custom_call.1} parent=35 // pred_region
          %327 = vst [vmem:[#allocation2] sm:$0xff] 0.0
        $region56: #{tpu_custom_call.1} parent=35 // pred_fallthru
          _
        %v328 = vld [vmem:[#allocation2] sm:$0xff]
        %v329 = vld [vmem:[%s275] sm:$0xff]
        %v330 = vld [vmem:[#allocation6] sm:$0xff]
        %v331 = vld [vmem:[#allocation6 + $0x8] sm:$0xff]
        %v332 = vld [vmem:[#allocation6 + $0x10] sm:$0xff]
        %v333 = vld [vmem:[#allocation6 + $0x18] sm:$0xff]
        %v334 = vld [vmem:[#allocation6 + $0x20] sm:$0xff]
        %v335 = vld [vmem:[#allocation6 + $0x28] sm:$0xff]
        %v336 = vld [vmem:[#allocation6 + $0x30] sm:$0xff]
        %v337 = vld [vmem:[#allocation6 + $0x38] sm:$0xff]
        %v338 = vld [vmem:[#allocation6 + $0x40] sm:$0xff]
        %v339 = vld [vmem:[#allocation6 + $0x48] sm:$0xff]
        %v340 = vld [vmem:[#allocation6 + $0x50] sm:$0xff]
        %v341 = vld [vmem:[#allocation6 + $0x58] sm:$0xff]
        %v342 = vld [vmem:[#allocation6 + $0x60] sm:$0xff]
        %v343 = vld [vmem:[#allocation6 + $0x68] sm:$0xff]
        %v344 = vld [vmem:[#allocation6 + $0x70] sm:$0xff]
        %v345 = vld [vmem:[#allocation6 + $0x78] sm:$0xff]
        %346 = vmatprep.subr.mxu0 0.0
        %347 = vmatpush1.msra.mxu0 %v330
        %348 = vmatprep.subr.mxu0 0.0
        %349 = vmatpush1.msra.mxu0 %v331
        %350 = vmatprep.subr.mxu0 0.0
        %351 = vmatpush1.msra.mxu0 %v332
        %352 = vmatprep.subr.mxu0 0.0
        %353 = vmatpush1.msra.mxu0 %v333
        %354 = vmatprep.subr.mxu0 0.0
        %355 = vmatpush1.msra.mxu0 %v334
        %356 = vmatprep.subr.mxu0 0.0
        %357 = vmatpush1.msra.mxu0 %v335
        %358 = vmatprep.subr.mxu0 0.0
        %359 = vmatpush1.msra.mxu0 %v336
        %360 = vmatprep.subr.mxu0 0.0
        %361 = vmatpush1.msra.mxu0 %v337
        %362 = vmatprep.subr.mxu0 0.0
        %363 = vmatpush1.msra.mxu0 %v338
        %364 = vmatprep.subr.mxu0 0.0
        %365 = vmatpush1.msra.mxu0 %v339
        %366 = vmatprep.subr.mxu0 0.0
        %367 = vmatpush1.msra.mxu0 %v340
        %368 = vmatprep.subr.mxu0 0.0
        %369 = vmatpush1.msra.mxu0 %v341
        %370 = vmatprep.subr.mxu0 0.0
        %371 = vmatpush1.msra.mxu0 %v342
        %372 = vmatprep.subr.mxu0 0.0
        %373 = vmatpush1.msra.mxu0 %v343
        %374 = vmatprep.subr.mxu0 0.0
        %375 = vmatpush1.msra.mxu0 %v344
        %376 = vmatprep.subr.mxu0 0.0
        %377 = vmatpush1.msra.mxu0 %v345
        %378 = vmatprep.subr.mxu0 0.0
        %379 = vmatpush1.msra.mxu0 0.0
        %380 = vmatprep.subr.mxu0 0.0
        %381 = vmatpush1.msra.mxu0 0.0
        %382 = vmatprep.subr.mxu0 0.0
        %383 = vmatpush1.msra.mxu0 0.0
        %384 = vmatprep.subr.mxu0 0.0
        %385 = vmatpush1.msra.mxu0 0.0
        %386 = vmatprep.subr.mxu0 0.0
        %387 = vmatpush1.msra.mxu0 0.0
        %388 = vmatprep.subr.mxu0 0.0
        %389 = vmatpush1.msra.mxu0 0.0
        %390 = vmatprep.subr.mxu0 0.0
        %391 = vmatpush1.msra.mxu0 0.0
        %392 = vmatprep.subr.mxu0 0.0
        %393 = vmatpush1.msra.mxu0 0.0
        %394 = vmatprep.subr.mxu0 0.0
        %395 = vmatpush1.msra.mxu0 0.0
        %396 = vmatprep.subr.mxu0 0.0
        %397 = vmatpush1.msra.mxu0 0.0
        %398 = vmatprep.subr.mxu0 0.0
        %399 = vmatpush1.msra.mxu0 0.0
        %400 = vmatprep.subr.mxu0 0.0
        %401 = vmatpush1.msra.mxu0 0.0
        %402 = vmatprep.subr.mxu0 0.0
        %403 = vmatpush1.msra.mxu0 0.0
        %404 = vmatprep.subr.mxu0 0.0
        %405 = vmatpush1.msra.mxu0 0.0
        %406 = vmatprep.subr.mxu0 0.0
        %407 = vmatpush1.msra.mxu0 0.0
        %408 = vmatprep.subr.mxu0 0.0
        %409 = vmatpush1.msra.mxu0 0.0
        %410 = vmatprep.mubr.f32.mxu0 0.0
        %411 = vmatmul.mubr.f32.gmra.mrb[0].mxu0 %v329
        %v412 = vpop.f32.mrb[0].mxu0
        %v413 = vadd.f32 0.0, %v412
        %v414 = vpop.f32.mrb[0].mxu0
        %415 = vdwg.mxu0
        %v416 = vadd.f32 %v328, %v413
        %417 = vst [vmem:[#allocation2] sm:$0xff] %v416
        // Predicated region
        $region57: #{tpu_custom_call.1} parent=35 // pred_check
          %p418 = pneg %p323
        $region58: #{tpu_custom_call.1} parent=35 // pred_check_branch
          %420 = sbr.rel (%p418) target = $region60
        $region59: #{tpu_custom_call.1} parent=35 // pred_region
          %v421 = vld [vmem:[#allocation2] sm:$0xff]
          %v422 = vld [vmem:[#allocation8] sm:$0x1]
          %v424 = vlaneseq
          %v425 = vshrl.u32 %v424, 7
          %v426 = vsub.s32 0, %v425
          %v427 = vrot.slane %v422, %v426
          %v429 = vadd.f32 %v421, %v427
          %v430 = vmul.f32 %v429, 0.70710677
          %v431 = vand.u32 2147483647, %v430
          %v432 = vmul.f32 %v431, 0.3275911
          %v433 = vadd.f32 %v432, 1.0
          %v434 = vrcp.pop %v433
          %v435 = vmul.f32 1.0, %v434
          %v436 = vmul.f32 %v435, 1.0614054
          %v437 = vadd.f32 %v436, -1.4531521
          %v438 = vmul.f32 %v435, %v437
          %v439 = vadd.f32 %v438, 1.4214138
          %v440 = vmul.f32 %v435, %v439
          %v441 = vadd.f32 %v440, -0.28449672
          %v442 = vmul.f32 %v435, %v441
          %v443 = vadd.f32 %v442, 0.2548296
          %v444 = vmul.f32 %v435, %v443
          %v445 = vsub.f32 0.0, %v431
          %v446 = vmul.f32 %v445, %v431
          %v447 = vmul.f32 %v446, 1.442695
          %v448 = vpow.pop %v447
          %v449 = vmul.f32 %v444, %v448
          %v450 = vsub.f32 1.0, %v449
          %vm451 = vcmp.ge.f32.partialorder %v430, 0.0
          %v452 = vsub.f32 0.0, %v450
          %v453 = vsel %vm451, %v450, %v452
          %v454 = vmul.f32 %v429, 0.5
          %v455 = vadd.f32 %v453, 1.0
          %v456 = vmul.f32 %v454, %v455
          %v457 = vld [vmem:[%s292] sm:$0xff]
          %v458 = vadd.f32 %v457, %v456
          %459 = vst [vmem:[%s321] sm:$0xff] %v458
        $region60: #{tpu_custom_call.1} parent=35 // pred_fallthru
          _
        %s460 = sand.u32 %s164, 1
        %s461 = scalar_lea.sflag [#allocation5], %s460
        %s462 = sand.u32 %s164, 1
        %s463 = smul.addr %s462, 8
        %s464 = scalar_lea.vmem [#allocation11], %s463
        // Predicated region
        $region61: #{tpu_custom_call.1} parent=35 // pred_check
          %p465 = pneg %p174
        $region62: #{tpu_custom_call.1} parent=35 // pred_check_branch
          %467 = sbr.rel (%p465) target = $region64
        $region63: #{tpu_custom_call.1} parent=35 // pred_region
          %s469 = ssub.s32 128, 128
          %470 = vsyncadd %s461, %s469
          %s471 = sadd.s32 %s31, %s30
          %s472 = smul.addr %s471, 128
          %s473 = scalar_lea.hbm %s4, %s472
          %s475 = sshll.u32 %s464, 4
          %s476 = int_to_ptr.vmem [resolvable:$true] %s475
          %478 = dma.vmem_to_hbm [thread:$0]  %s476, 128, %s473, %s461
        $region64: #{tpu_custom_call.1} parent=35 // pred_fallthru
          _
      $region36: #{tpu_custom_call.1} parent=5 // pred_fallthru
        _
      %p479 = scmp.le.s32.totalorder 2, %s20
      // Predicated region
      $region65: #{tpu_custom_call.1} parent=5 // pred_check
        %p480 = pneg %p479
      $region66: #{tpu_custom_call.1} parent=5 // pred_check_branch
        %482 = sbr.rel (%p480) target = $region68
      $region67: #{tpu_custom_call.1} parent=5 // pred_region
        %s483 = ssub.s32 %s20, 2
        // Predicated region
        $region69: #{tpu_custom_call.1} parent=67 // pred_check
          %p484 = pneg %p180
        $region70: #{tpu_custom_call.1} parent=67 // pred_check_branch
          %486 = sbr.rel (%p484) target = $region72
        $region71: #{tpu_custom_call.1} parent=67 // pred_region
          %s487 = sand.u32 %s165, 1
          %s488 = scalar_lea.sflag [#allocation5], %s487
          %s489 = sand.u32 %s165, 1
          %s490 = smul.addr %s489, 8
          %s491 = scalar_lea.vmem [#allocation11], %s490
          %492 = dma.done %s488, 128
        $region72: #{tpu_custom_call.1} parent=67 // pred_fallthru
          _
      $region68: #{tpu_custom_call.1} parent=5 // pred_fallthru
        _
    $region6: #{tpu_custom_call.1} parent=1 // loop_footer
      %s24 = sadd.s32 1, %s20
    $region7: #{tpu_custom_call.1} parent=1 // loop_footer_branch
      %19 = sbr.rel target = $region3
    $region8: #{tpu_custom_call.1} parent=1 // loop_exit
      _
    %493 = vsyncpa [#allocation4], 1
    %s494 = scalar_lea.sflag [#allocation4], 1
    %495 = vsyncpa %s494, 1
    %496 = vsyncpa [#allocation7], 1
    %497 = vsyncpa [#allocation10], 1
    %s498 = scalar_lea.sflag [#allocation10], 1
    %499 = vsyncpa %s498, 1
    %500 = vsyncpa [#allocation5], 1
    %s501 = scalar_lea.sflag [#allocation5], 1
    %502 = vsyncpa %s501, 1

</llo_original>
